<compile_context>
chip_gen: v6e
topology: v6e:2x2x1
jax: 0.10.0
libtpu: 0.0.40
codegen_flags: <defaults>
</compile_context>

<pallas_src>
import jax
import jax.numpy as jnp
from jax import lax
from jax.experimental import pallas as pl
from jax.experimental.pallas import tpu as pltpu

LEAKY_SLOPE = 0.2
MAX_TILE_B = 2048  # per-step batch tile cap (VMEM ~5 MiB at this size; >=2 tiles for huge B)


def _round_up(x, m):
    return ((x + m - 1) // m) * m


def _choose_tile_b(batch):
    """Batch-tile size: large enough to amortize per-grid-step pipeline overhead, a multiple
    of 256 when tiling (MXU-M / sublane aligned), and capped so very large batches still
    split into >= 2 tiles for the two TensorCores on v7x."""
    if batch <= MAX_TILE_B:
        return batch  # single tile covering the full batch (block dims equal array dims)
    half = pl.cdiv(batch, 2)
    return min(MAX_TILE_B, _round_up(half, 256))


def _discriminator_kernel(x_ref, w1_ref, b1_ref, w2_ref, b2_ref, w3_ref, b3_ref, o_ref):
    # Layer 1: cast the streamed x tile to bf16 in-kernel (hidden under DMA/MXU),
    # bf16 MXU matmul with f32 accumulation, f32 bias + LeakyReLU on the VPU.
    xb = x_ref[...].astype(jnp.bfloat16)
    h1 = jnp.dot(xb, w1_ref[...], preferred_element_type=jnp.float32) + b1_ref[...]
    h1 = jnp.maximum(h1, LEAKY_SLOPE * h1)

    # Layer 2: Linear + LeakyReLU (same dtype split).
    h2 = jnp.dot(h1.astype(jnp.bfloat16), w2_ref[...],
                 preferred_element_type=jnp.float32) + b2_ref[...]
    h2 = jnp.maximum(h2, LEAKY_SLOPE * h2)

    # Output layer (128 -> 1): thin MXU contraction -> lane-major (1, TILE_B) logits,
    # so the result lands lane-dense for the store with no cross-lane reduce / relayout.
    logits = lax.dot_general(
        w3_ref[...], h2,
        dimension_numbers=(((1,), (1,)), ((), ())),
        preferred_element_type=jnp.float32,
    ) + b3_ref[0, 0]                                           # scalar bias from SMEM

    # Numerically stable sigmoid (exact reciprocal; exp of a non-positive value only).
    pos = logits >= 0.0
    e = jnp.exp(jnp.where(pos, -logits, logits))
    sig = jnp.where(pos, 1.0, e) * pl.reciprocal(1.0 + e, approx=False)
    o_ref[...] = sig.astype(o_ref.dtype)                        # lane-dense (1, TILE_B) store


def discriminator_forward(x, params):
    """x: (B, in_features) float32. params: dict of f32 weights/biases. Returns (B, 1) f32."""
    B, in_features = x.shape
    tile_b = _choose_tile_b(B)
    num_tiles = pl.cdiv(B, tile_b)
    padded_b = num_tiles * tile_b

    # Tiny one-time casts of the (VMEM-resident) weights to bf16; x is NOT padded or cast here.
    w1b = params["w1"].astype(jnp.bfloat16)
    w2b = params["w2"].astype(jnp.bfloat16)
    b1 = params["b1"].astype(jnp.float32)
    b2 = params["b2"].astype(jnp.float32)
    w3_row = params["w3"].reshape(1, -1).astype(jnp.float32)    # (1, 128), f32 for the thin MXU dot
    b3_s = params["b3"].reshape(1, 1).astype(jnp.float32)       # scalar -> SMEM

    def resident(shape):
        # Revisits block (0, 0) every grid step -> stays VMEM-resident, no re-DMA per step.
        return pl.BlockSpec(shape, lambda i: (0,) * len(shape))

    out = pl.pallas_call(
        _discriminator_kernel,
        out_shape=jax.ShapeDtypeStruct((1, padded_b), jnp.float32),
        grid=(num_tiles,),
        in_specs=[
            pl.BlockSpec((tile_b, in_features), lambda i: (i, 0)),  # x tiles stream per step (f32)
            resident(w1b.shape), resident(b1.shape),                # VMEM-resident weights
            resident(w2b.shape), resident(b2.shape),
            resident(w3_row.shape),
            pl.BlockSpec(memory_space=pltpu.MemorySpace.SMEM),      # b3 scalar in SMEM
        ],
        out_specs=pl.BlockSpec((1, tile_b), lambda i: (0, i)),      # lane-dense output tiles
        compiler_params=pltpu.CompilerParams(dimension_semantics=("parallel",)),
    )(x, w1b, b1, w2b, b2, w3_row, b3_s)

    # Overhang rows of a ragged last tile are discarded here (never observed downstream).
    return out[0, :B].reshape(B, 1)


def init_params(key, in_features, hidden_layers=(256, 128), out_features=1):
    """Deterministic PyTorch-style (U(-1/sqrt(fan_in), 1/sqrt(fan_in))) init."""
    layers = (in_features,) + tuple(hidden_layers) + (out_features,)
    params = {}
    for i, name in enumerate(["1", "2", "3"]):
        fan_in, fan_out = layers[i], layers[i + 1]
        key, kw, kb = jax.random.split(key, 3)
        bound = 1.0 / (fan_in ** 0.5)
        params["w" + name] = jax.random.uniform(
            kw, (fan_in, fan_out), jnp.float32, minval=-bound, maxval=bound
        )
        params["b" + name] = jax.random.uniform(
            kb, (1, fan_out), jnp.float32, minval=-bound, maxval=bound
        )
    return params


def reference_forward(x, params):
    """Pure-JAX reference mirroring the kernel's bf16 MXU-operand quantization."""
    xb = x.astype(jnp.bfloat16)
    w1b = params["w1"].astype(jnp.bfloat16)
    w2b = params["w2"].astype(jnp.bfloat16)
    h1 = jnp.dot(xb, w1b, preferred_element_type=jnp.float32) + params["b1"]
    h1 = jnp.maximum(h1, LEAKY_SLOPE * h1)
    h2 = jnp.dot(h1.astype(jnp.bfloat16), w2b, preferred_element_type=jnp.float32) + params["b2"]
    h2 = jnp.maximum(h2, LEAKY_SLOPE * h2)
    logits = h2 @ params["w3"] + params["b3"]
    return jax.nn.sigmoid(logits)


if __name__ == "__main__":
    key = jax.random.PRNGKey(0)
    key, kx, kp = jax.random.split(key, 3)

    batch = 8
    in_features = 32  # small synthetic credit-card feature-vector size

    x = jax.random.normal(kx, (batch, in_features), dtype=jnp.float32)
    params = init_params(kp, in_features)

    out = discriminator_forward(x, params)
    out = jax.block_until_ready(out)

    ref = reference_forward(x, params)
    assert out.shape == (batch, 1), out.shape
    max_err = jnp.max(jnp.abs(out - ref))
    assert jnp.allclose(out, ref, atol=5e-3, rtol=0.0), f"max abs err = {max_err}"

    print("KERNEL_OK")
</pallas_src>

<mosaic_0001>
module attributes {stable_mosaic.version = 11 : i64} {
  func.func @_discriminator_kernel(%arg0: i32, %arg1: memref<8x32xf32, #tpu.memory_space<vmem>>, %arg2: memref<32x256xbf16, #tpu.memory_space<vmem>>, %arg3: memref<1x256xf32, #tpu.memory_space<vmem>>, %arg4: memref<256x128xbf16, #tpu.memory_space<vmem>>, %arg5: memref<1x128xf32, #tpu.memory_space<vmem>>, %arg6: memref<1x128xf32, #tpu.memory_space<vmem>>, %arg7: memref<1x1xf32, #tpu.memory_space<smem>>, %arg8: memref<1x8xf32, #tpu.memory_space<vmem>>) attributes {dimension_semantics = [#tpu.dimension_semantics<parallel>], iteration_bounds = array<i64: 1>, scalar_prefetch = 0 : i64, scratch_operands = 0 : i64, tpu.core_type = #tpu.core_type<tc>, window_params = [{transform_indices = @transform_0, window_bounds = array<i64: 8, 32>}, {pipeline_mode = #tpu.pipeline_mode<synchronous>, transform_indices = @transform_1, window_bounds = array<i64: 32, 256>}, {pipeline_mode = #tpu.pipeline_mode<synchronous>, transform_indices = @transform_2, window_bounds = array<i64: 1, 256>}, {pipeline_mode = #tpu.pipeline_mode<synchronous>, transform_indices = @transform_3, window_bounds = array<i64: 256, 128>}, {pipeline_mode = #tpu.pipeline_mode<synchronous>, transform_indices = @transform_4, window_bounds = array<i64: 1, 128>}, {pipeline_mode = #tpu.pipeline_mode<synchronous>, transform_indices = @transform_5, window_bounds = array<i64: 1, 128>}, {transform_indices = @transform_6, window_bounds = array<i64: 1, 1>}, {transform_indices = @transform_7, window_bounds = array<i64: 1, 8>}]} {
    %c0 = arith.constant 0 : index
    %c0_0 = arith.constant 0 : index
    %0 = vector.load %arg1[%c0, %c0_0] : memref<8x32xf32, #tpu.memory_space<vmem>>, vector<8x32xf32>
    %1 = arith.truncf %0 : vector<8x32xf32> to vector<8x32xbf16>
    %c0_1 = arith.constant 0 : index
    %c0_2 = arith.constant 0 : index
    %2 = vector.load %arg2[%c0_1, %c0_2] : memref<32x256xbf16, #tpu.memory_space<vmem>>, vector<32x256xbf16>
    %cst = arith.constant dense<0.000000e+00> : vector<8x256xf32>
    %3 = tpu.matmul %1, %2, %cst {dimension_numbers = #tpu.dot_dimension_numbers<[1], [0], [0], [1], [0, 0, 1, 1], [], []>} : vector<8x32xbf16>, vector<32x256xbf16>, vector<8x256xf32> -> vector<8x256xf32>
    %c0_3 = arith.constant 0 : index
    %c0_4 = arith.constant 0 : index
    %4 = vector.load %arg3[%c0_3, %c0_4] : memref<1x256xf32, #tpu.memory_space<vmem>>, vector<1x256xf32>
    %5 = vector.broadcast %4 : vector<1x256xf32> to vector<8x256xf32>
    %6 = arith.addf %3, %5 : vector<8x256xf32>
    %cst_5 = arith.constant 2.000000e-01 : f32
    %7 = vector.broadcast %cst_5 : f32 to vector<8x256xf32>
    %8 = arith.mulf %7, %6 : vector<8x256xf32>
    %9 = arith.maximumf %6, %8 : vector<8x256xf32>
    %10 = arith.truncf %9 : vector<8x256xf32> to vector<8x256xbf16>
    %c0_6 = arith.constant 0 : index
    %c0_7 = arith.constant 0 : index
    %11 = vector.load %arg4[%c0_6, %c0_7] : memref<256x128xbf16, #tpu.memory_space<vmem>>, vector<256x128xbf16>
    %cst_8 = arith.constant dense<0.000000e+00> : vector<8x128xf32>
    %12 = tpu.matmul %10, %11, %cst_8 {dimension_numbers = #tpu.dot_dimension_numbers<[1], [0], [0], [1], [0, 0, 1, 1], [], []>} : vector<8x256xbf16>, vector<256x128xbf16>, vector<8x128xf32> -> vector<8x128xf32>
    %c0_9 = arith.constant 0 : index
    %c0_10 = arith.constant 0 : index
    %13 = vector.load %arg5[%c0_9, %c0_10] : memref<1x128xf32, #tpu.memory_space<vmem>>, vector<1x128xf32>
    %14 = vector.broadcast %13 : vector<1x128xf32> to vector<8x128xf32>
    %15 = arith.addf %12, %14 : vector<8x128xf32>
    %cst_11 = arith.constant 2.000000e-01 : f32
    %16 = vector.broadcast %cst_11 : f32 to vector<8x128xf32>
    %17 = arith.mulf %16, %15 : vector<8x128xf32>
    %18 = arith.maximumf %15, %17 : vector<8x128xf32>
    %c0_12 = arith.constant 0 : index
    %c0_13 = arith.constant 0 : index
    %19 = vector.load %arg6[%c0_12, %c0_13] : memref<1x128xf32, #tpu.memory_space<vmem>>, vector<1x128xf32>
    %cst_14 = arith.constant dense<0.000000e+00> : vector<1x8xf32>
    %20 = tpu.matmul %19, %18, %cst_14 {dimension_numbers = #tpu.dot_dimension_numbers<[1], [1], [0], [0], [0, 0, 1, 0], [], []>} : vector<1x128xf32>, vector<8x128xf32>, vector<1x8xf32> -> vector<1x8xf32>
    %c0_15 = arith.constant 0 : index
    %c0_16 = arith.constant 0 : index
    %21 = memref.load %arg7[%c0_15, %c0_16] : memref<1x1xf32, #tpu.memory_space<smem>>
    %22 = vector.broadcast %21 : f32 to vector<1x8xf32>
    %23 = arith.addf %20, %22 : vector<1x8xf32>
    %cst_17 = arith.constant 0.000000e+00 : f32
    %24 = vector.broadcast %cst_17 : f32 to vector<1x8xf32>
    %25 = arith.cmpf oge, %23, %24 : vector<1x8xf32>
    %cst_18 = arith.constant 0.000000e+00 : f32
    %26 = vector.broadcast %cst_18 : f32 to vector<1x8xf32>
    %27 = arith.subf %26, %23 : vector<1x8xf32>
    %28 = arith.select %25, %27, %23 : vector<1x8xi1>, vector<1x8xf32>
    %29 = math.exp %28 : vector<1x8xf32>
    %cst_19 = arith.constant 1.000000e+00 : f32
    %30 = vector.broadcast %cst_19 : f32 to vector<1x8xf32>
    %31 = arith.select %25, %30, %29 : vector<1x8xi1>, vector<1x8xf32>
    %cst_20 = arith.constant 1.000000e+00 : f32
    %32 = vector.broadcast %cst_20 : f32 to vector<1x8xf32>
    %33 = arith.addf %32, %29 : vector<1x8xf32>
    %34 = tpu.reciprocal %33 : vector<1x8xf32> -> vector<1x8xf32>
    %35 = arith.mulf %31, %34 : vector<1x8xf32>
    %c0_21 = arith.constant 0 : index
    %c0_22 = arith.constant 0 : index
    %36 = vector.load %arg8[%c0_21, %c0_22] : memref<1x8xf32, #tpu.memory_space<vmem>>, vector<1x8xf32>
    tpu.vector_store %arg8[%c0_21, %c0_22], %35 {strides = array<i32>} : memref<1x8xf32, #tpu.memory_space<vmem>>, vector<1x8xf32>,
    return
  }
  func.func @transform_0(%arg0: i32) -> (i32, i32) {
    %c0_i32 = arith.constant 0 : i32
    %c0_i32_0 = arith.constant 0 : i32
    return %arg0, %c0_i32 : i32, i32
  }
  func.func @transform_1(%arg0: i32) -> (i32, i32) {
    %c0_i32 = arith.constant 0 : i32
    %c0_i32_0 = arith.constant 0 : i32
    %c0_i32_1 = arith.constant 0 : i32
    return %c0_i32, %c0_i32_0 : i32, i32
  }
  func.func @transform_2(%arg0: i32) -> (i32, i32) {
    %c0_i32 = arith.constant 0 : i32
    %c0_i32_0 = arith.constant 0 : i32
    %c0_i32_1 = arith.constant 0 : i32
    return %c0_i32, %c0_i32_0 : i32, i32
  }
  func.func @transform_3(%arg0: i32) -> (i32, i32) {
    %c0_i32 = arith.constant 0 : i32
    %c0_i32_0 = arith.constant 0 : i32
    %c0_i32_1 = arith.constant 0 : i32
    return %c0_i32, %c0_i32_0 : i32, i32
  }
  func.func @transform_4(%arg0: i32) -> (i32, i32) {
    %c0_i32 = arith.constant 0 : i32
    %c0_i32_0 = arith.constant 0 : i32
    %c0_i32_1 = arith.constant 0 : i32
    return %c0_i32, %c0_i32_0 : i32, i32
  }
  func.func @transform_5(%arg0: i32) -> (i32, i32) {
    %c0_i32 = arith.constant 0 : i32
    %c0_i32_0 = arith.constant 0 : i32
    %c0_i32_1 = arith.constant 0 : i32
    return %c0_i32, %c0_i32_0 : i32, i32
  }
  func.func @transform_6(%arg0: i32) -> (i32, i32) {
    %c0_i32 = arith.constant 0 : i32
    %c0_i32_0 = arith.constant 0 : i32
    %c0_i32_1 = arith.constant 0 : i32
    return %c0_i32, %c0_i32_0 : i32, i32
  }
  func.func @transform_7(%arg0: i32) -> (i32, i32) {
    %c0_i32 = arith.constant 0 : i32
    %c0_i32_0 = arith.constant 0 : i32
    return %c0_i32, %arg0 : i32, i32
  }
}

</mosaic_0001>

<llo_original>
// kernel: tpu_custom_call.1
$region0: #{tpu_custom_call.1}
  #allocation0 [shape = 'u32[]', space=smem, size = 0x4, offset = 0x4, fixed_abs, tag = 'smem constant byte address 0x4 - core index']
  #allocation1 [shape = 'u32[144,128]{1,0:T(1,128)}', space=vmem, size = 0x12000, scoped, tag = 'internal scratch']
  #allocation2 [shape = 'f32[1,1]{1,0:T(1,128)S(6)}', space=smem, size = 0x200, scoped, tag = 'scoped memory for tpu_custom_call.1']
  %s0 = inlined_call_operand.hbm [shape: f32[8,32], index: 0, kind: input, shape index: {}]
  %s1 = inlined_call_operand.hbm [shape: bf16[32,256], index: 1, kind: input, shape index: {}]
  %s2 = inlined_call_operand.vmem [shape: f32[1,256], index: 2, kind: input, shape index: {}]
  %s3 = inlined_call_operand.hbm [shape: bf16[256,128], index: 3, kind: input, shape index: {}]
  %s4 = inlined_call_operand.vmem [shape: f32[1,128], index: 4, kind: input, shape index: {}]
  %s5 = inlined_call_operand.vmem [shape: f32[1,128], index: 5, kind: input, shape index: {}]
  %s6 = inlined_call_operand.<no memory space> [shape: f32[1,1], index: 6, kind: input, shape index: {}]
  %s7 = inlined_call_operand.hbm [shape: f32[1,8], index: 7, kind: output, shape index: {}]
  %s8 = sld [smem:[#allocation0]]
  $region50: #{tpu_custom_call.1} parent=0
    _
  %s10 = ssub.s32 1, %s8
  %s11 = scalar_select 0, %s10, %s8
  %12 = sst [smem:[#allocation2]] %s6
  $region1: #{tpu_custom_call.1} parent=0
    #allocation3 [shape = 'u8[4096]{0}', space=vmem, size = 0x1000, scoped, tag = 'input window, operand 0, single buffered']
    #allocation4 [shape = 's32[1]{0}', space=sflag, size = 0x4, scoped, tag = 'scoped memory for tpu_custom_call.1']
    #allocation5 [shape = 's32[1]{0}', space=sflag, size = 0x4, scoped, tag = 'scoped memory for tpu_custom_call.1']
    #allocation6 [shape = 'u8[16384]{0}', space=vmem, size = 0x4000, scoped, tag = 'input window, operand 1, single buffered']
    #allocation7 [shape = 's32[1]{0}', space=sflag, size = 0x4, scoped, tag = 'scoped memory for tpu_custom_call.1']
    #allocation8 [shape = 'u8[65536]{0}', space=vmem, size = 0x10000, scoped, tag = 'input window, operand 3, single buffered']
    #allocation9 [shape = 'u8[512]{0}', space=vmem, size = 0x400, scoped, tag = 'output window, operand 0, single buffered']
    %13 = vsyncpa [#allocation4], 0
    %14 = vsyncpa [#allocation7], 0
    %15 = vsyncpa [#allocation5], 0
    // Predicated region
    $region2: #{tpu_custom_call.1} parent=1 // pred_check
      _
    $region3: #{tpu_custom_call.1} parent=1 // pred_check_branch
      %17 = sbr.rel (0) target = $region5
    $region4: #{tpu_custom_call.1} parent=1 // pred_region
      %s19 = ssub.s32 128, 128
      %20 = vsyncadd [#allocation4], %s19
      %s22 = sshll.u32 [#allocation3], 4
      %s23 = int_to_ptr.vmem [resolvable:$true] %s22
      %25 = dma.hbm_to_vmem [thread:$0]  %s0, 128, %s23, [#allocation4]
    $region5: #{tpu_custom_call.1} parent=1 // pred_fallthru
      _
    // Predicated region
    $region6: #{tpu_custom_call.1} parent=1 // pred_check
      _
    $region7: #{tpu_custom_call.1} parent=1 // pred_check_branch
      %27 = sbr.rel (0) target = $region9
    $region8: #{tpu_custom_call.1} parent=1 // pred_region
      %s29 = ssub.s32 512, 512
      %30 = vsyncadd [#allocation7], %s29
      %s31 = sshll.u32 [#allocation6], 4
      %s32 = int_to_ptr.vmem [resolvable:$true] %s31
      %37 = dma.hbm_to_vmem [thread:$0]  %s1, 512, %s32, [#allocation7], 128, 128, 8
    $region9: #{tpu_custom_call.1} parent=1 // pred_fallthru
      _
    // Predicated region
    $region10: #{tpu_custom_call.1} parent=1 // pred_check
      _
    $region11: #{tpu_custom_call.1} parent=1 // pred_check_branch
      %39 = sbr.rel (0) target = $region13
    $region12: #{tpu_custom_call.1} parent=1 // pred_region
      _
    $region13: #{tpu_custom_call.1} parent=1 // pred_fallthru
      _
    // Predicated region
    $region14: #{tpu_custom_call.1} parent=1 // pred_check
      _
    $region15: #{tpu_custom_call.1} parent=1 // pred_check_branch
      %41 = sbr.rel (0) target = $region17
    $region16: #{tpu_custom_call.1} parent=1 // pred_region
      %s43 = ssub.s32 2048, 2048
      %44 = vsyncadd [#allocation7], %s43
      %s45 = sshll.u32 [#allocation8], 4
      %s46 = int_to_ptr.vmem [resolvable:$true] %s45
      %51 = dma.hbm_to_vmem [thread:$0]  %s3, 2048, %s46, [#allocation7], 64, 64, 4
    $region17: #{tpu_custom_call.1} parent=1 // pred_fallthru
      _
    // Predicated region
    $region18: #{tpu_custom_call.1} parent=1 // pred_check
      _
    $region19: #{tpu_custom_call.1} parent=1 // pred_check_branch
      %53 = sbr.rel (0) target = $region21
    $region20: #{tpu_custom_call.1} parent=1 // pred_region
      _
    $region21: #{tpu_custom_call.1} parent=1 // pred_fallthru
      _
    // Predicated region
    $region22: #{tpu_custom_call.1} parent=1 // pred_check
      _
    $region23: #{tpu_custom_call.1} parent=1 // pred_check_branch
      %55 = sbr.rel (0) target = $region25
    $region24: #{tpu_custom_call.1} parent=1 // pred_region
      _
    $region25: #{tpu_custom_call.1} parent=1 // pred_fallthru
      _
    // Predicated region
    $region26: #{tpu_custom_call.1} parent=1 // pred_check
      _
    $region27: #{tpu_custom_call.1} parent=1 // pred_check_branch
      %57 = sbr.rel (0) target = $region29
    $region28: #{tpu_custom_call.1} parent=1 // pred_region
      _
    $region29: #{tpu_custom_call.1} parent=1 // pred_fallthru
      _
    // Predicated region
    $region30: #{tpu_custom_call.1} parent=1 // pred_check
      _
    $region31: #{tpu_custom_call.1} parent=1 // pred_check_branch
      %59 = sbr.rel (0) target = $region33
    $region32: #{tpu_custom_call.1} parent=1 // pred_region
      %60 = dma.done [#allocation4], 128
    $region33: #{tpu_custom_call.1} parent=1 // pred_fallthru
      _
    // Predicated region
    $region34: #{tpu_custom_call.1} parent=1 // pred_check
      _
    $region35: #{tpu_custom_call.1} parent=1 // pred_check_branch
      %62 = sbr.rel (0) target = $region37
    $region36: #{tpu_custom_call.1} parent=1 // pred_region
      %63 = dma.done [#allocation7], 512
    $region37: #{tpu_custom_call.1} parent=1 // pred_fallthru
      _
    // Predicated region
    $region38: #{tpu_custom_call.1} parent=1 // pred_check
      _
    $region39: #{tpu_custom_call.1} parent=1 // pred_check_branch
      %65 = sbr.rel (0) target = $region41
    $region40: #{tpu_custom_call.1} parent=1 // pred_region
      %66 = dma.done [#allocation7], 2048
    $region41: #{tpu_custom_call.1} parent=1 // pred_fallthru
      _
    %v68 = vld [vmem:[#allocation3] sm:$0xff]
    %v69 = vpack.c.bf16 %v68, %v68
    %v70 = vld [vmem:[#allocation6] sm:$0xff]
    %v71 = vld [vmem:[#allocation6 + $0x8] sm:$0xff]
    %v72 = vld [vmem:[#allocation6 + $0x10] sm:$0xff]
    %v73 = vld [vmem:[#allocation6 + $0x18] sm:$0xff]
    %v74 = vld [vmem:[%s2] sm:$0x3]
    %v76 = vlaneseq
    %v77 = vshrl.u32 %v76, 7
    %v78 = vsub.s32 0, %v77
    %v79 = vrot.slane %v74, %v78
    %v80 = vlaneseq
    %v81 = vshrl.u32 %v80, 7
    %v82 = vsub.s32 1, %v81
    %v83 = vrot.slane %v74, %v82
    %v90 = vunpack.c.l.b16 %v70
    %v91 = vunpack.c.h.b16 %v70
    %v92 = vunpack.c.l.b16 %v71
    %v93 = vunpack.c.h.b16 %v71
    %v94 = vunpack.c.l.b16 %v72
    %v95 = vunpack.c.h.b16 %v72
    %v96 = vunpack.c.l.b16 %v73
    %v97 = vunpack.c.h.b16 %v73
    %v98 = vpack.c.b16 %v92, %v90
    %v99 = vpack.c.b16 %v93, %v91
    %v100 = vpack.c.b16 %v96, %v94
    %v101 = vpack.c.b16 %v97, %v95
    %vm106 = vcmask 261120
    %v108 = vsel %vm106, %v69, 0
    %110 = vmatprep.subr.bf16.mxu0 0
    %111 = vmatpush1.bf16.msra.mxu0 0
    %112 = vmatprep.subr.bf16.mxu0 0
    %113 = vmatpush1.bf16.msra.mxu0 0
    %114 = vmatprep.subr.bf16.mxu0 0
    %115 = vmatpush1.bf16.msra.mxu0 0
    %116 = vmatprep.subr.bf16.mxu0 0
    %117 = vmatpush1.bf16.msra.mxu0 0
    %118 = vmatprep.subr.bf16.mxu0 0
    %119 = vmatpush1.bf16.msra.mxu0 0
    %120 = vmatprep.subr.bf16.mxu0 0
    %121 = vmatpush1.bf16.msra.mxu0 0
    %122 = vmatprep.subr.bf16.mxu0 %v101
    %123 = vmatpush1.bf16.msra.mxu0 %v100
    %124 = vmatprep.subr.bf16.mxu0 %v99
    %125 = vmatpush1.bf16.msra.mxu0 %v98
    %126 = vmatprep.subr.bf16.mxu0 0
    %127 = vmatpush2.bf16.msra.mxu0 0
    %128 = vmatprep.subr.bf16.mxu0 0
    %129 = vmatpush2.bf16.msra.mxu0 0
    %130 = vmatprep.subr.bf16.mxu0 0
    %131 = vmatpush2.bf16.msra.mxu0 0
    %132 = vmatprep.subr.bf16.mxu0 0
    %133 = vmatpush2.bf16.msra.mxu0 0
    %134 = vmatprep.subr.bf16.mxu0 0
    %135 = vmatpush2.bf16.msra.mxu0 0
    %136 = vmatprep.subr.bf16.mxu0 0
    %137 = vmatpush2.bf16.msra.mxu0 0
    %138 = vmatprep.subr.bf16.mxu0 0
    %139 = vmatpush2.bf16.msra.mxu0 0
    %140 = vmatprep.subr.bf16.mxu0 0
    %141 = vmatpush2.bf16.msra.mxu0 0
    %142 = vmatprep.mubr.bf16.mxu0 0
    %143 = vmatmul.mubr.bf16.gmra.mxu0 %v108
    %v144 = vpop.f32.mrf.mxu0
    %v145 = vadd.f32 %v79, %v144
    %v146 = vpop.f32.mrf.mxu0
    %v147 = vadd.f32 %v83, %v146
    %v148 = vpop.f32.mrf.mxu0
    %v149 = vpop.f32.mrf.mxu0
    %150 = vdwg.mxu0
    %v151 = vmul.f32 %v145, 0.2
    %v152 = vmul.f32 %v147, 0.2
    %v153 = vmax.f32 %v145, %v151
    %v154 = vmax.f32 %v147, %v152
    %v155 = vpack.c.bf16 %v153, %v153
    %v156 = vpack.c.bf16 %v154, %v154
    %v157 = vld [vmem:[#allocation8] sm:$0xf]
    %v158 = vld [vmem:[#allocation8 + $0x4] sm:$0xf]
    %v159 = vld [vmem:[#allocation8 + $0x8] sm:$0xf]
    %v160 = vld [vmem:[#allocation8 + $0xc] sm:$0xf]
    %v161 = vld [vmem:[#allocation8 + $0x10] sm:$0xf]
    %v162 = vld [vmem:[#allocation8 + $0x14] sm:$0xf]
    %v163 = vld [vmem:[#allocation8 + $0x18] sm:$0xf]
    %v164 = vld [vmem:[#allocation8 + $0x1c] sm:$0xf]
    %v165 = vld [vmem:[#allocation8 + $0x20] sm:$0xf]
    %v166 = vld [vmem:[#allocation8 + $0x24] sm:$0xf]
    %v167 = vld [vmem:[#allocation8 + $0x28] sm:$0xf]
    %v168 = vld [vmem:[#allocation8 + $0x2c] sm:$0xf]
    %v169 = vld [vmem:[#allocation8 + $0x30] sm:$0xf]
    %v170 = vld [vmem:[#allocation8 + $0x34] sm:$0xf]
    %v171 = vld [vmem:[#allocation8 + $0x38] sm:$0xf]
    %v172 = vld [vmem:[#allocation8 + $0x3c] sm:$0xf]
    %v173 = vld [vmem:[#allocation8 + $0x40] sm:$0xf]
    %v174 = vld [vmem:[#allocation8 + $0x44] sm:$0xf]
    %v175 = vld [vmem:[#allocation8 + $0x48] sm:$0xf]
    %v176 = vld [vmem:[#allocation8 + $0x4c] sm:$0xf]
    %v177 = vld [vmem:[#allocation8 + $0x50] sm:$0xf]
    %v178 = vld [vmem:[#allocation8 + $0x54] sm:$0xf]
    %v179 = vld [vmem:[#allocation8 + $0x58] sm:$0xf]
    %v180 = vld [vmem:[#allocation8 + $0x5c] sm:$0xf]
    %v181 = vld [vmem:[#allocation8 + $0x60] sm:$0xf]
    %v182 = vld [vmem:[#allocation8 + $0x64] sm:$0xf]
    %v183 = vld [vmem:[#allocation8 + $0x68] sm:$0xf]
    %v184 = vld [vmem:[#allocation8 + $0x6c] sm:$0xf]
    %v185 = vld [vmem:[#allocation8 + $0x70] sm:$0xf]
    %v186 = vld [vmem:[#allocation8 + $0x74] sm:$0xf]
    %v187 = vld [vmem:[#allocation8 + $0x78] sm:$0xf]
    %v188 = vld [vmem:[#allocation8 + $0x7c] sm:$0xf]
    %v189 = vld [vmem:[%s4] sm:$0x1]
    %v191 = vlaneseq
    %v192 = vshrl.u32 %v191, 7
    %v193 = vsub.s32 0, %v192
    %v194 = vrot.slane %v189, %v193
    %v228 = vunpack.c.l.b16 %v157
    %v229 = vunpack.c.l.b16 %v158
    %v230 = vunpack.c.l.b16 %v159
    %v231 = vunpack.c.l.b16 %v160
    %v232 = vunpack.c.l.b16 %v161
    %v233 = vunpack.c.l.b16 %v162
    %v234 = vunpack.c.l.b16 %v163
    %v235 = vunpack.c.l.b16 %v164
    %v236 = vunpack.c.l.b16 %v165
    %v237 = vunpack.c.l.b16 %v166
    %v238 = vunpack.c.l.b16 %v167
    %v239 = vunpack.c.l.b16 %v168
    %v240 = vunpack.c.l.b16 %v169
    %v241 = vunpack.c.l.b16 %v170
    %v242 = vunpack.c.l.b16 %v171
    %v243 = vunpack.c.l.b16 %v172
    %v244 = vunpack.c.l.b16 %v173
    %v245 = vunpack.c.l.b16 %v174
    %v246 = vunpack.c.l.b16 %v175
    %v247 = vunpack.c.l.b16 %v176
    %v248 = vunpack.c.l.b16 %v177
    %v249 = vunpack.c.l.b16 %v178
    %v250 = vunpack.c.l.b16 %v179
    %v251 = vunpack.c.l.b16 %v180
    %v252 = vunpack.c.l.b16 %v181
    %v253 = vunpack.c.l.b16 %v182
    %v254 = vunpack.c.l.b16 %v183
    %v255 = vunpack.c.l.b16 %v184
    %v256 = vunpack.c.l.b16 %v185
    %v257 = vunpack.c.l.b16 %v186
    %v258 = vunpack.c.l.b16 %v187
    %v259 = vunpack.c.l.b16 %v188
    %v260 = vpack.c.b16 %v229, %v228
    %v261 = vpack.c.b16 %v231, %v230
    %v262 = vpack.c.b16 %v233, %v232
    %v263 = vpack.c.b16 %v235, %v234
    %v264 = vpack.c.b16 %v237, %v236
    %v265 = vpack.c.b16 %v239, %v238
    %v266 = vpack.c.b16 %v241, %v240
    %v267 = vpack.c.b16 %v243, %v242
    %v268 = vpack.c.b16 %v245, %v244
    %v269 = vpack.c.b16 %v247, %v246
    %v270 = vpack.c.b16 %v249, %v248
    %v271 = vpack.c.b16 %v251, %v250
    %v272 = vpack.c.b16 %v253, %v252
    %v273 = vpack.c.b16 %v255, %v254
    %v274 = vpack.c.b16 %v257, %v256
    %v275 = vpack.c.b16 %v259, %v258
    %292 = vmatprep.subr.bf16.mxu0 0
    %293 = vmatpush1.bf16.msra.mxu0 %v267
    %294 = vmatprep.subr.bf16.mxu0 0
    %295 = vmatpush1.bf16.msra.mxu0 %v266
    %296 = vmatprep.subr.bf16.mxu0 0
    %297 = vmatpush1.bf16.msra.mxu0 %v265
    %298 = vmatprep.subr.bf16.mxu0 0
    %299 = vmatpush1.bf16.msra.mxu0 %v264
    %300 = vmatprep.subr.bf16.mxu0 0
    %301 = vmatpush1.bf16.msra.mxu0 %v263
    %302 = vmatprep.subr.bf16.mxu0 0
    %303 = vmatpush1.bf16.msra.mxu0 %v262
    %304 = vmatprep.subr.bf16.mxu0 0
    %305 = vmatpush1.bf16.msra.mxu0 %v261
    %306 = vmatprep.subr.bf16.mxu0 0
    %307 = vmatpush1.bf16.msra.mxu0 %v260
    %308 = vmatprep.subr.bf16.mxu0 0
    %309 = vmatpush2.bf16.msra.mxu0 %v275
    %310 = vmatprep.subr.bf16.mxu0 0
    %311 = vmatpush2.bf16.msra.mxu0 %v274
    %312 = vmatprep.subr.bf16.mxu0 0
    %313 = vmatpush2.bf16.msra.mxu0 %v273
    %314 = vmatprep.subr.bf16.mxu0 0
    %315 = vmatpush2.bf16.msra.mxu0 %v272
    %316 = vmatprep.subr.bf16.mxu0 0
    %317 = vmatpush2.bf16.msra.mxu0 %v271
    %318 = vmatprep.subr.bf16.mxu0 0
    %319 = vmatpush2.bf16.msra.mxu0 %v270
    %320 = vmatprep.subr.bf16.mxu0 0
    %321 = vmatpush2.bf16.msra.mxu0 %v269
    %322 = vmatprep.subr.bf16.mxu0 0
    %323 = vmatpush2.bf16.msra.mxu0 %v268
    %324 = vmatprep.mubr.bf16.mxu0 %v156
    %325 = vmatmul.mubr.bf16.gmra.mxu0 %v155
    %v326 = vpop.f32.mrf.mxu0
    %v327 = vadd.f32 %v194, %v326
    %v328 = vpop.f32.mrf.mxu0
    %v329 = vpop.f32.mrf.mxu0
    %v330 = vpop.f32.mrf.mxu0
    %331 = vdwg.mxu0
    %v332 = vmul.f32 %v327, 0.2
    %v333 = vmax.f32 %v327, %v332
    %v334 = vld [vmem:[%s5] sm:$0x1]
    %s335 = sld [smem:[#allocation2]]
    %v336 = vstv %s335
    %337 = vmatprep.subr.mxu0 0.0
    %338 = vmatpush1.xpose.msra.mxu0 0.0
    %339 = vmatprep.subr.mxu0 0.0
    %340 = vmatpush1.xpose.msra.mxu0 0.0
    %341 = vmatprep.subr.mxu0 0.0
    %342 = vmatpush1.xpose.msra.mxu0 0.0
    %343 = vmatprep.subr.mxu0 0.0
    %344 = vmatpush1.xpose.msra.mxu0 0.0
    %345 = vmatprep.subr.mxu0 0.0
    %346 = vmatpush1.xpose.msra.mxu0 0.0
    %347 = vmatprep.subr.mxu0 0.0
    %348 = vmatpush1.xpose.msra.mxu0 0.0
    %349 = vmatprep.subr.mxu0 0.0
    %350 = vmatpush1.xpose.msra.mxu0 0.0
    %351 = vmatprep.subr.mxu0 0.0
    %352 = vmatpush1.xpose.msra.mxu0 0.0
    %353 = vmatprep.subr.mxu0 0.0
    %354 = vmatpush1.xpose.msra.mxu0 0.0
    %355 = vmatprep.subr.mxu0 0.0
    %356 = vmatpush1.xpose.msra.mxu0 0.0
    %357 = vmatprep.subr.mxu0 0.0
    %358 = vmatpush1.xpose.msra.mxu0 0.0
    %359 = vmatprep.subr.mxu0 0.0
    %360 = vmatpush1.xpose.msra.mxu0 0.0
    %361 = vmatprep.subr.mxu0 0.0
    %362 = vmatpush1.xpose.msra.mxu0 0.0
    %363 = vmatprep.subr.mxu0 0.0
    %364 = vmatpush1.xpose.msra.mxu0 0.0
    %365 = vmatprep.subr.mxu0 0.0
    %366 = vmatpush1.xpose.msra.mxu0 0.0
    %367 = vmatprep.subr.mxu0 0.0
    %368 = vmatpush1.xpose.msra.mxu0 %v333
    %369 = vmatprep.subr.mxu0 0.0
    %370 = vmatpush2.xpose.msra.mxu0 0.0
    %371 = vmatprep.subr.mxu0 0.0
    %372 = vmatpush2.xpose.msra.mxu0 0.0
    %373 = vmatprep.subr.mxu0 0.0
    %374 = vmatpush2.xpose.msra.mxu0 0.0
    %375 = vmatprep.subr.mxu0 0.0
    %376 = vmatpush2.xpose.msra.mxu0 0.0
    %377 = vmatprep.subr.mxu0 0.0
    %378 = vmatpush2.xpose.msra.mxu0 0.0
    %379 = vmatprep.subr.mxu0 0.0
    %380 = vmatpush2.xpose.msra.mxu0 0.0
    %381 = vmatprep.subr.mxu0 0.0
    %382 = vmatpush2.xpose.msra.mxu0 0.0
    %383 = vmatprep.subr.mxu0 0.0
    %384 = vmatpush2.xpose.msra.mxu0 0.0
    %385 = vmatprep.subr.mxu0 0.0
    %386 = vmatpush2.xpose.msra.mxu0 0.0
    %387 = vmatprep.subr.mxu0 0.0
    %388 = vmatpush2.xpose.msra.mxu0 0.0
    %389 = vmatprep.subr.mxu0 0.0
    %390 = vmatpush2.xpose.msra.mxu0 0.0
    %391 = vmatprep.subr.mxu0 0.0
    %392 = vmatpush2.xpose.msra.mxu0 0.0
    %393 = vmatprep.subr.mxu0 0.0
    %394 = vmatpush2.xpose.msra.mxu0 0.0
    %395 = vmatprep.subr.mxu0 0.0
    %396 = vmatpush2.xpose.msra.mxu0 0.0
    %397 = vmatprep.subr.mxu0 0.0
    %398 = vmatpush2.xpose.msra.mxu0 0.0
    %399 = vmatprep.subr.mxu0 0.0
    %400 = vmatpush2.xpose.msra.mxu0 0.0
    %401 = vmatprep.mubr.f32.mxu0 0.0
    %402 = vmatmul.mubr.f32.gmra.mxu0 %v334
    %v403 = vpop.f32.mrf.mxu0
    %v404 = vadd.f32 %v336, %v403
    %v405 = vpop.f32.mrf.mxu0
    %406 = vdwg.mxu0
    %vm407 = vcmp.ge.f32.partialorder %v404, 0.0
    %v408 = vsub.f32 0.0, %v404
    %v409 = vsel %vm407, %v408, %v404
    %v410 = vmul.f32 %v409, 1.442695
    %v411 = vpow.pop %v410
    %v412 = vsel %vm407, 1.0, %v411
    %v413 = vadd.f32 %v411, 1.0
    %v414 = vrcp.pop %v413
    %v415 = vmul.f32 %v412, %v414
    %vm416 = vcmask 57344
    %417 = vst.msk [vmem:[#allocation9] sm:$0x1] %vm416, %v415
    // Predicated region
    $region42: #{tpu_custom_call.1} parent=1 // pred_check
      _
    $region43: #{tpu_custom_call.1} parent=1 // pred_check_branch
      %419 = sbr.rel (0) target = $region45
    $region44: #{tpu_custom_call.1} parent=1 // pred_region
      %s421 = ssub.s32 16, 16
      %422 = vsyncadd [#allocation5], %s421
      %s424 = sshll.u32 [#allocation9], 4
      %s425 = int_to_ptr.vmem [resolvable:$true] %s424
      %427 = dma.vmem_to_hbm [thread:$0]  %s425, 16, %s7, [#allocation5]
    $region45: #{tpu_custom_call.1} parent=1 // pred_fallthru
      _
    // Predicated region
    $region46: #{tpu_custom_call.1} parent=1 // pred_check
      _
    $region47: #{tpu_custom_call.1} parent=1 // pred_check_branch
      %429 = sbr.rel (0) target = $region49
    $region48: #{tpu_custom_call.1} parent=1 // pred_region
      %430 = dma.done [#allocation5], 16
    $region49: #{tpu_custom_call.1} parent=1 // pred_fallthru
      _
    %431 = vsyncpa [#allocation4], 1
    %432 = vsyncpa [#allocation7], 1
    %433 = vsyncpa [#allocation5], 1

</llo_original>
